<compile_context>
chip_gen: v7x
topology: tpu7x:2x2x1
jax: 0.10.0
libtpu: 0.0.40
codegen_flags: <defaults>
</compile_context>

<pallas_src>
import math
import functools

import jax
import jax.numpy as jnp
from jax.experimental import pallas as pl
from jax.experimental.pallas import tpu as pltpu


VMEM_LIMIT_BYTES = 48 * 1024 * 1024   # < v7x 64 MiB physical, > default scoped limits


def _choose_tile(n, preferred):
    """Use the full extent when small / non-divisible, else the preferred tile."""
    if n <= preferred or n % preferred:
        return n
    return preferred


def _round_up(n, m):
    return ((n + m - 1) // m) * m


def _deinterleave_perm(n_heads, head_dim):
    """Per-head permutation: even (real) features first, odd (imag) features second."""
    half = head_dim // 2
    idx = []
    for h in range(n_heads):
        base = h * head_dim
        idx.extend(base + 2 * j for j in range(half))
        idx.extend(base + 2 * j + 1 for j in range(half))
    return jnp.asarray(idx, dtype=jnp.int32)


# ----------------------- fused QKV projection + rotary kernel -----------------------

def _qkv_rope_kernel(x_ref, w_ref, cos_ref, sin_ref, o_ref, acc_ref, *, head_dim):
    k_idx = pl.program_id(3)

    @pl.when(k_idx == 0)
    def _():
        acc_ref[...] = jnp.zeros_like(acc_ref)

    acc_ref[...] += jnp.dot(x_ref[...], w_ref[...],
                            preferred_element_type=jnp.float32)

    @pl.when(k_idx == pl.num_programs(3) - 1)
    def _():
        y = acc_ref[...]                       # (ts, tn) f32
        tn = y.shape[-1]
        half = head_dim // 2
        # Per-head "rotate half": weights were de-interleaved at init, so the
        # rotary partner of each column sits half a head away inside this tile.
        parts = []
        for c in range(tn // head_dim):
            base = c * head_dim
            parts.append(y[:, base + half: base + head_dim])
            parts.append(y[:, base: base + half])
        y_sw = jnp.concatenate(parts, axis=-1)
        o_ref[...] = (y * cos_ref[...] + y_sw * sin_ref[...]).astype(o_ref.dtype)


def qkv_rope_pallas(x, w_t, cos_t, sin_t, head_dim):
    B, S, K = x.shape
    K2, N = w_t.shape
    assert K == K2 and N % head_dim == 0
    ts = _choose_tile(S, 256)
    tk = _choose_tile(K, 512)
    tn = _choose_tile(N, 512)
    if tn % head_dim:
        tn = N
    grid = (B, S // ts, N // tn, K // tk)
    kernel = functools.partial(_qkv_rope_kernel, head_dim=head_dim)
    return pl.pallas_call(
        kernel,
        out_shape=jax.ShapeDtypeStruct((B, S, N), jnp.bfloat16),
        grid=grid,
        in_specs=[
            pl.BlockSpec((None, ts, tk), lambda b, s, n, k: (b, s, k)),
            pl.BlockSpec((tk, tn), lambda b, s, n, k: (k, n)),
            pl.BlockSpec((ts, tn), lambda b, s, n, k: (s, n)),
            pl.BlockSpec((ts, tn), lambda b, s, n, k: (s, n)),
        ],
        out_specs=pl.BlockSpec((None, ts, tn), lambda b, s, n, k: (b, s, n)),
        scratch_shapes=[pltpu.VMEM((ts, tn), jnp.float32)],
        compiler_params=pltpu.CompilerParams(
            dimension_semantics=("parallel", "parallel", "parallel", "arbitrary"),
            vmem_limit_bytes=VMEM_LIMIT_BYTES),
    )(x, w_t, cos_t, sin_t)


# --------------------------------- tiled matmul ---------------------------------

def _matmul_kernel(x_ref, w_ref, o_ref, acc_ref):
    k_idx = pl.program_id(2)

    @pl.when(k_idx == 0)
    def _():
        acc_ref[...] = jnp.zeros_like(acc_ref)

    acc_ref[...] += jnp.dot(x_ref[...], w_ref[...],
                            preferred_element_type=jnp.float32)

    @pl.when(k_idx == pl.num_programs(2) - 1)
    def _():
        o_ref[...] = acc_ref[...].astype(o_ref.dtype)


def matmul_pallas(x, w_t, out_dtype):
    M, K = x.shape
    K2, N = w_t.shape
    assert K == K2
    tm = _choose_tile(M, 256)
    tn = _choose_tile(N, 256)
    tk = _choose_tile(K, 512)
    return pl.pallas_call(
        _matmul_kernel,
        out_shape=jax.ShapeDtypeStruct((M, N), out_dtype),
        grid=(M // tm, N // tn, K // tk),
        in_specs=[pl.BlockSpec((tm, tk), lambda i, j, k: (i, k)),
                  pl.BlockSpec((tk, tn), lambda i, j, k: (k, j))],
        out_specs=pl.BlockSpec((tm, tn), lambda i, j, k: (i, j)),
        scratch_shapes=[pltpu.VMEM((tm, tn), jnp.float32)],
        compiler_params=pltpu.CompilerParams(
            dimension_semantics=("parallel", "parallel", "arbitrary"),
            vmem_limit_bytes=VMEM_LIMIT_BYTES),
    )(x, w_t)


# --------------------------- in-place KV-cache writeback ---------------------------

def _kv_cache_update_kernel(kn_ref, vn_ref, ck_hbm, cv_hbm, ck_out, cv_out):
    del ck_hbm, cv_hbm                  # aliased to outputs; untouched rows stay in place
    ck_out[...] = kn_ref[...]
    cv_out[...] = vn_ref[...]


@functools.partial(jax.jit, static_argnums=(4,), donate_argnums=(2, 3))
def update_kv_cache(k_new, v_new, cache_k, cache_v, start_pos):
    B, Hkv, S, Dh = k_new.shape
    if start_pos % S:
        # TODO(synk): unaligned start_pos falls back to an XLA dynamic_update_slice.
        ck = jax.lax.dynamic_update_slice(cache_k, k_new, (0, 0, start_pos, 0))
        cv = jax.lax.dynamic_update_slice(cache_v, v_new, (0, 0, start_pos, 0))
        return ck, cv
    new_spec = pl.BlockSpec((None, None, S, Dh), lambda b, h: (b, h, 0, 0))
    out_spec = pl.BlockSpec((None, None, S, Dh),
                            lambda b, h: (b, h, start_pos // S, 0))
    return pl.pallas_call(
        _kv_cache_update_kernel,
        out_shape=(jax.ShapeDtypeStruct(cache_k.shape, cache_k.dtype),
                   jax.ShapeDtypeStruct(cache_v.shape, cache_v.dtype)),
        grid=(B, Hkv),
        in_specs=[new_spec, new_spec,
                  pl.BlockSpec(memory_space=pl.ANY),
                  pl.BlockSpec(memory_space=pl.ANY)],
        out_specs=(out_spec, out_spec),
        input_output_aliases={2: 0, 3: 1},
        compiler_params=pltpu.CompilerParams(
            dimension_semantics=("parallel", "parallel"),
            vmem_limit_bytes=VMEM_LIMIT_BYTES),
    )(k_new, v_new, cache_k, cache_v)


# --------------------------- flash attention (online softmax) ---------------------------

def _flash_attn_kernel(q_ref, k_ref, v_ref, o_ref, m_ref, l_ref, acc_ref, *,
                       scale, kv_len, block_kv):
    kv_idx = pl.program_id(3)

    @pl.when(kv_idx == 0)
    def _():
        m_ref[...] = jnp.full_like(m_ref, -jnp.inf)
        l_ref[...] = jnp.zeros_like(l_ref)
        acc_ref[...] = jnp.zeros_like(acc_ref)

    q = q_ref[...]                                     # (tq, Dh) bf16
    k = k_ref[...]                                     # (tkv, Dh) bf16
    s = jax.lax.dot_general(q, k, (((1,), (1,)), ((), ())),
                            preferred_element_type=jnp.float32) * scale
    if kv_len % block_kv:                              # static: mask padded tail tile
        kv_pos = kv_idx * block_kv + jax.lax.broadcasted_iota(jnp.int32, s.shape, 1)
        s = jnp.where(kv_pos < kv_len, s, -jnp.inf)

    m_prev = m_ref[...]
    m_new = jnp.maximum(m_prev, jnp.max(s, axis=-1, keepdims=True))
    alpha = jnp.exp(m_prev - m_new)
    p = jnp.exp(s - m_new)
    l_ref[...] = alpha * l_ref[...] + jnp.sum(p, axis=-1, keepdims=True)
    acc_ref[...] = alpha * acc_ref[...] + jnp.dot(
        p.astype(v_ref.dtype), v_ref[...], preferred_element_type=jnp.float32)
    m_ref[...] = m_new

    @pl.when(kv_idx == pl.num_programs(3) - 1)
    def _():
        o_ref[...] = (acc_ref[...] *
                      pl.reciprocal(l_ref[...], approx=True)).astype(o_ref.dtype)


def flash_attention_pallas(q, cache_k, cache_v, *, kv_len, n_rep, scale):
    B, Hq, S, Dh = q.shape
    MB, Hkv, MS, Dh2 = cache_k.shape
    assert Dh == Dh2 and Hq == Hkv * n_rep and kv_len <= MS and B <= MB
    tq = _choose_tile(S, 256)
    tkv = min(512, _round_up(kv_len, 8), MS)
    if tkv % 8 and tkv != MS:
        tkv = MS
    nkv = -(-kv_len // tkv)
    grid = (B, Hq, S // tq, nkv)

    kernel = functools.partial(_flash_attn_kernel, scale=scale,
                               kv_len=kv_len, block_kv=tkv)
    q_spec = pl.BlockSpec((None, None, tq, Dh), lambda b, h, qi, kv: (b, h, qi, 0))
    kv_spec = pl.BlockSpec((None, None, tkv, Dh),
                           lambda b, h, qi, kv: (b, h // n_rep, kv, 0))
    return pl.pallas_call(
        kernel,
        out_shape=jax.ShapeDtypeStruct((B, Hq, S, Dh), jnp.bfloat16),
        grid=grid,
        in_specs=[q_spec, kv_spec, kv_spec],
        out_specs=q_spec,
        scratch_shapes=[pltpu.VMEM((tq, 1), jnp.float32),
                        pltpu.VMEM((tq, 1), jnp.float32),
                        pltpu.VMEM((tq, Dh), jnp.float32)],
        compiler_params=pltpu.CompilerParams(
            dimension_semantics=("parallel", "parallel", "parallel", "arbitrary"),
            vmem_limit_bytes=VMEM_LIMIT_BYTES),
    )(q, cache_k, cache_v)


# --------------------------------- module wrapper ---------------------------------

class SelfAttentionPallas:
    """Pallas/JAX re-implementation of LLaMA2 SelfAttention.forward (bf16 compute)."""

    def __init__(self, dim, n_heads, n_kv_heads, max_batch_size, max_seq_len, key):
        self.n_kv_heads = n_heads if n_kv_heads is None else n_kv_heads
        self.n_heads_q = n_heads
        self.n_rep = self.n_heads_q // self.n_kv_heads
        self.head_dim = dim // n_heads
        self.dim = dim
        kq, kk, kv, ko = jax.random.split(key, 4)
        s = 0.02
        # nn.Linear weight layout: (out_features, in_features), no bias (f32 masters)
        self.wq = jax.random.normal(kq, (n_heads * self.head_dim, dim), jnp.float32) * s
        self.wk = jax.random.normal(kk, (self.n_kv_heads * self.head_dim, dim), jnp.float32) * s
        self.wv = jax.random.normal(kv, (self.n_kv_heads * self.head_dim, dim), jnp.float32) * s
        self.wo = jax.random.normal(ko, (dim, n_heads * self.head_dim), jnp.float32) * s

        # Fused, pre-transposed bf16 QKV weight; Q/K output features de-interleaved
        # per head so rotary becomes a per-head rotate-half inside the kernel.
        pq = _deinterleave_perm(self.n_heads_q, self.head_dim)
        pk = _deinterleave_perm(self.n_kv_heads, self.head_dim)
        w_fused = jnp.concatenate([self.wq[pq], self.wk[pk], self.wv], axis=0)
        self.w_qkv_t = jnp.asarray(w_fused.T, dtype=jnp.bfloat16)     # (dim, Nq+Nk+Nv)
        self.wo_t = jnp.asarray(self.wo.T, dtype=jnp.bfloat16)        # (Hq*Dh, dim)

        # KV cache kept head-major and bf16 (internal layout choice).
        self.cache_k = jnp.zeros(
            (max_batch_size, self.n_kv_heads, max_seq_len, self.head_dim), jnp.bfloat16)
        self.cache_v = jnp.zeros_like(self.cache_k)

    def _rope_tables(self, cos, sin):
        """(S, Dh/2) cos/sin -> (S, Nq+Nk+Nv) tables matching the fused QKV columns."""
        Hq, Hkv, Dh = self.n_heads_q, self.n_kv_heads, self.head_dim
        S = cos.shape[0]
        cos = cos.astype(jnp.float32)
        sin = sin.astype(jnp.float32)
        cos_h = jnp.concatenate([cos, cos], axis=-1)         # (S, Dh)
        sin_h = jnp.concatenate([-sin, sin], axis=-1)        # (S, Dh)
        cos_t = jnp.concatenate(
            [jnp.tile(cos_h, (1, Hq)), jnp.tile(cos_h, (1, Hkv)),
             jnp.ones((S, Hkv * Dh), jnp.float32)], axis=-1)
        sin_t = jnp.concatenate(
            [jnp.tile(sin_h, (1, Hq)), jnp.tile(sin_h, (1, Hkv)),
             jnp.zeros((S, Hkv * Dh), jnp.float32)], axis=-1)
        return cos_t, sin_t

    def forward(self, x, start_pos, cos, sin):
        B, S, dim = x.shape
        Hq, Hkv, Dh = self.n_heads_q, self.n_kv_heads, self.head_dim
        assert dim == self.dim

        cos_t, sin_t = self._rope_tables(cos, sin)
        qkv = qkv_rope_pallas(x.astype(jnp.bfloat16), self.w_qkv_t, cos_t, sin_t, Dh)

        nq, nk = Hq * Dh, Hkv * Dh
        xq = qkv[..., :nq].reshape(B, S, Hq, Dh)
        xk = qkv[..., nq:nq + nk].reshape(B, S, Hkv, Dh)
        xv = qkv[..., nq + nk:].reshape(B, S, Hkv, Dh)

        # New-token (B,S,H,Dh) -> (B,H,S,Dh); cheap (only the fresh tokens).
        # TODO(synk): fold these transposes into the QKV kernel out BlockSpec.
        q_t = jnp.transpose(xq, (0, 2, 1, 3))
        k_t = jnp.transpose(xk, (0, 2, 1, 3))
        v_t = jnp.transpose(xv, (0, 2, 1, 3))

        self.cache_k, self.cache_v = update_kv_cache(
            k_t, v_t, self.cache_k, self.cache_v, start_pos)

        kv_len = start_pos + S
        attn = flash_attention_pallas(
            q_t, self.cache_k, self.cache_v,
            kv_len=kv_len, n_rep=self.n_rep, scale=1.0 / math.sqrt(Dh))

        out2d = jnp.transpose(attn, (0, 2, 1, 3)).reshape(B * S, Hq * Dh)
        y = matmul_pallas(out2d, self.wo_t, out_dtype=x.dtype)
        return y.reshape(B, S, dim)


# ------------------------------ reference (jnp, same dtype policy) ------------------------------

def reference_forward(mod, x, start_pos, cos, sin):
    B, S, dim = x.shape
    Hq, Hkv, Dh = mod.n_heads_q, mod.n_kv_heads, mod.head_dim
    n_rep = mod.n_rep
    bf = jnp.bfloat16

    def mm(a, w_t):  # bf16 operands, f32 accumulation
        return jnp.dot(a.astype(bf), w_t.astype(bf), preferred_element_type=jnp.float32)

    x2d = x.reshape(B * S, dim)
    xq = mm(x2d, mod.wq.T).reshape(B, S, Hq, Dh)
    xk = mm(x2d, mod.wk.T).reshape(B, S, Hkv, Dh)
    xv = mm(x2d, mod.wv.T).reshape(B, S, Hkv, Dh)

    def rot(y):
        H = y.shape[2]
        yr = y.reshape(B, S, H, Dh // 2, 2)
        ye, yo = yr[..., 0], yr[..., 1]
        c = cos[None, :, None, :]
        s_ = sin[None, :, None, :]
        return jnp.stack([ye * c - yo * s_, ye * s_ + yo * c], axis=-1).reshape(B, S, H, Dh)

    xq = rot(xq).astype(bf)
    xk = rot(xk).astype(bf)
    xv = xv.astype(bf)

    cache_k = jnp.zeros((B, start_pos + S, Hkv, Dh), bf)
    cache_v = jnp.zeros_like(cache_k)
    cache_k = jax.lax.dynamic_update_slice(cache_k, xk, (0, start_pos, 0, 0))
    cache_v = jax.lax.dynamic_update_slice(cache_v, xv, (0, start_pos, 0, 0))
    keys = jnp.repeat(cache_k, n_rep, axis=2) if n_rep != 1 else cache_k
    vals = jnp.repeat(cache_v, n_rep, axis=2) if n_rep != 1 else cache_v

    q_t = jnp.transpose(xq, (0, 2, 1, 3))
    k_t = jnp.transpose(keys, (0, 2, 1, 3))
    v_t = jnp.transpose(vals, (0, 2, 1, 3))
    scores = jnp.einsum("bhqd,bhkd->bhqk", q_t, k_t,
                        preferred_element_type=jnp.float32) / math.sqrt(Dh)
    probs = jax.nn.softmax(scores, axis=-1)
    out = jnp.einsum("bhqk,bhkd->bhqd", probs.astype(bf), v_t,
                     preferred_element_type=jnp.float32)
    out2d = jnp.transpose(out, (0, 2, 1, 3)).reshape(B * S, Hq * Dh).astype(bf)
    y = jnp.dot(out2d, mod.wo.T.astype(bf), preferred_element_type=jnp.float32)
    return y.reshape(B, S, dim)


# ------------------------------------ main -----------------------------------

if __name__ == "__main__":
    # Small config consistent with the module: dim=64, n_heads=4 -> head_dim=16
    B, S, DIM, N_HEADS = 2, 8, 64, 4
    N_KV_HEADS = None
    MAX_B, MAX_S = 4, 16
    START_POS = 0
    HEAD_DIM = DIM // N_HEADS

    key = jax.random.PRNGKey(0)
    k_x, k_w = jax.random.split(key)
    x = jax.random.normal(k_x, (B, S, DIM), jnp.float32)

    # rotary frequencies for positions [start_pos, start_pos + S)
    inv_freq = 1.0 / (10000.0 ** (jnp.arange(0, HEAD_DIM, 2, dtype=jnp.float32) / HEAD_DIM))
    t = jnp.arange(START_POS, START_POS + S, dtype=jnp.float32)
    angles = jnp.outer(t, inv_freq)                 # (S, head_dim/2)
    cos, sin = jnp.cos(angles), jnp.sin(angles)

    mod = SelfAttentionPallas(DIM, N_HEADS, N_KV_HEADS, MAX_B, MAX_S, k_w)

    out = mod.forward(x, START_POS, cos, sin)
    out = jax.block_until_ready(out)

    ref = reference_forward(mod, x, START_POS, cos, sin)
    assert out.shape == (B, S, DIM)
    err = float(jnp.max(jnp.abs(out - ref)))
    assert jnp.allclose(out, ref, rtol=2e-2, atol=2e-3), f"mismatch vs reference, max abs err={err}"

    print("KERNEL_OK")
</pallas_src>

<mosaic_0001>
module attributes {stable_mosaic.version = 11 : i64} {
  func.func @_qkv_rope_kernel(%arg0: i32, %arg1: i32, %arg2: i32, %arg3: i32, %arg4: memref<1x8x64xbf16, #tpu.memory_space<vmem>>, %arg5: memref<64x192xbf16, #tpu.memory_space<vmem>>, %arg6: memref<8x192xf32, #tpu.memory_space<vmem>>, %arg7: memref<8x192xf32, #tpu.memory_space<vmem>>, %arg8: memref<1x8x192xbf16, #tpu.memory_space<vmem>>, %arg9: memref<8x192xf32, #tpu.memory_space<vmem>>) attributes {dimension_semantics = [#tpu.dimension_semantics<parallel>, #tpu.dimension_semantics<parallel>, #tpu.dimension_semantics<parallel>, #tpu.dimension_semantics<arbitrary>], iteration_bounds = array<i64: 2, 1, 1, 1>, scalar_prefetch = 0 : i64, scratch_operands = 1 : i64, tpu.core_type = #tpu.core_type<tc>, window_params = [{transform_indices = @transform_0, window_bounds = array<i64: 1, 8, 64>}, {transform_indices = @transform_1, window_bounds = array<i64: 64, 192>}, {transform_indices = @transform_2, window_bounds = array<i64: 8, 192>}, {transform_indices = @transform_3, window_bounds = array<i64: 8, 192>}, {transform_indices = @transform_4, window_bounds = array<i64: 1, 8, 192>}]} {
    %c0_i32 = arith.constant 0 : i32
    %0 = arith.cmpi eq, %arg3, %c0_i32 : i32
    %1 = arith.extui %0 : i1 to i32
    %c0_i32_0 = arith.constant 0 : i32
    %2 = arith.cmpi ne, %1, %c0_i32_0 : i32
    scf.if %2 {
      %cst_11 = arith.constant 0.000000e+00 : f32
      %13 = vector.broadcast %cst_11 : f32 to vector<8x192xf32>
      %c0_12 = arith.constant 0 : index
      %c0_13 = arith.constant 0 : index
      %14 = vector.load %arg9[%c0_12, %c0_13] : memref<8x192xf32, #tpu.memory_space<vmem>>, vector<8x192xf32>
      tpu.vector_store %arg9[%c0_12, %c0_13], %13 {strides = array<i32>} : memref<8x192xf32, #tpu.memory_space<vmem>>, vector<8x192xf32>,
    } else {
    }
    %c0 = arith.constant 0 : index
    %c0_1 = arith.constant 0 : index
    %3 = vector.load %arg9[%c0, %c0_1] : memref<8x192xf32, #tpu.memory_space<vmem>>, vector<8x192xf32>
    %c0_2 = arith.constant 0 : index
    %c0_3 = arith.constant 0 : index
    %c0_4 = arith.constant 0 : index
    %4 = vector.load %arg4[%c0_2, %c0_3, %c0_4] : memref<1x8x64xbf16, #tpu.memory_space<vmem>>, vector<1x8x64xbf16>
    %5 = vector.shape_cast %4 : vector<1x8x64xbf16> to vector<8x64xbf16>
    %c0_5 = arith.constant 0 : index
    %c0_6 = arith.constant 0 : index
    %6 = vector.load %arg5[%c0_5, %c0_6] : memref<64x192xbf16, #tpu.memory_space<vmem>>, vector<64x192xbf16>
    %cst = arith.constant dense<0.000000e+00> : vector<8x192xf32>
    %7 = tpu.matmul %5, %6, %cst {dimension_numbers = #tpu.dot_dimension_numbers<[1], [0], [0], [1], [0, 0, 1, 1], [], []>} : vector<8x64xbf16>, vector<64x192xbf16>, vector<8x192xf32> -> vector<8x192xf32>
    %8 = arith.addf %3, %7 : vector<8x192xf32>
    %c0_7 = arith.constant 0 : index
    %c0_8 = arith.constant 0 : index
    %9 = vector.load %arg9[%c0_7, %c0_8] : memref<8x192xf32, #tpu.memory_space<vmem>>, vector<8x192xf32>
    tpu.vector_store %arg9[%c0_7, %c0_8], %8 {strides = array<i32>} : memref<8x192xf32, #tpu.memory_space<vmem>>, vector<8x192xf32>,
    %c0_i32_9 = arith.constant 0 : i32
    %10 = arith.cmpi eq, %arg3, %c0_i32_9 : i32
    %11 = arith.extui %10 : i1 to i32
    %c0_i32_10 = arith.constant 0 : i32
    %12 = arith.cmpi ne, %11, %c0_i32_10 : i32
    scf.if %12 {
      %c0_11 = arith.constant 0 : index
      %c0_12 = arith.constant 0 : index
      %13 = vector.load %arg9[%c0_11, %c0_12] : memref<8x192xf32, #tpu.memory_space<vmem>>, vector<8x192xf32>
      %14 = vector.extract_strided_slice %13 {offsets = [0, 8], sizes = [8, 8], strides = [1, 1]} : vector<8x192xf32> to vector<8x8xf32>
      %15 = vector.extract_strided_slice %13 {offsets = [0, 0], sizes = [8, 8], strides = [1, 1]} : vector<8x192xf32> to vector<8x8xf32>
      %16 = vector.extract_strided_slice %13 {offsets = [0, 24], sizes = [8, 8], strides = [1, 1]} : vector<8x192xf32> to vector<8x8xf32>
      %17 = vector.extract_strided_slice %13 {offsets = [0, 16], sizes = [8, 8], strides = [1, 1]} : vector<8x192xf32> to vector<8x8xf32>
      %18 = vector.extract_strided_slice %13 {offsets = [0, 40], sizes = [8, 8], strides = [1, 1]} : vector<8x192xf32> to vector<8x8xf32>
      %19 = vector.extract_strided_slice %13 {offsets = [0, 32], sizes = [8, 8], strides = [1, 1]} : vector<8x192xf32> to vector<8x8xf32>
      %20 = vector.extract_strided_slice %13 {offsets = [0, 56], sizes = [8, 8], strides = [1, 1]} : vector<8x192xf32> to vector<8x8xf32>
      %21 = vector.extract_strided_slice %13 {offsets = [0, 48], sizes = [8, 8], strides = [1, 1]} : vector<8x192xf32> to vector<8x8xf32>
      %22 = vector.extract_strided_slice %13 {offsets = [0, 72], sizes = [8, 8], strides = [1, 1]} : vector<8x192xf32> to vector<8x8xf32>
      %23 = vector.extract_strided_slice %13 {offsets = [0, 64], sizes = [8, 8], strides = [1, 1]} : vector<8x192xf32> to vector<8x8xf32>
      %24 = vector.extract_strided_slice %13 {offsets = [0, 88], sizes = [8, 8], strides = [1, 1]} : vector<8x192xf32> to vector<8x8xf32>
      %25 = vector.extract_strided_slice %13 {offsets = [0, 80], sizes = [8, 8], strides = [1, 1]} : vector<8x192xf32> to vector<8x8xf32>
      %26 = vector.extract_strided_slice %13 {offsets = [0, 104], sizes = [8, 8], strides = [1, 1]} : vector<8x192xf32> to vector<8x8xf32>
      %27 = vector.extract_strided_slice %13 {offsets = [0, 96], sizes = [8, 8], strides = [1, 1]} : vector<8x192xf32> to vector<8x8xf32>
      %28 = vector.extract_strided_slice %13 {offsets = [0, 120], sizes = [8, 8], strides = [1, 1]} : vector<8x192xf32> to vector<8x8xf32>
      %29 = vector.extract_strided_slice %13 {offsets = [0, 112], sizes = [8, 8], strides = [1, 1]} : vector<8x192xf32> to vector<8x8xf32>
      %30 = vector.extract_strided_slice %13 {offsets = [0, 136], sizes = [8, 8], strides = [1, 1]} : vector<8x192xf32> to vector<8x8xf32>
      %31 = vector.extract_strided_slice %13 {offsets = [0, 128], sizes = [8, 8], strides = [1, 1]} : vector<8x192xf32> to vector<8x8xf32>
      %32 = vector.extract_strided_slice %13 {offsets = [0, 152], sizes = [8, 8], strides = [1, 1]} : vector<8x192xf32> to vector<8x8xf32>
      %33 = vector.extract_strided_slice %13 {offsets = [0, 144], sizes = [8, 8], strides = [1, 1]} : vector<8x192xf32> to vector<8x8xf32>
      %34 = vector.extract_strided_slice %13 {offsets = [0, 168], sizes = [8, 8], strides = [1, 1]} : vector<8x192xf32> to vector<8x8xf32>
      %35 = vector.extract_strided_slice %13 {offsets = [0, 160], sizes = [8, 8], strides = [1, 1]} : vector<8x192xf32> to vector<8x8xf32>
      %36 = vector.extract_strided_slice %13 {offsets = [0, 184], sizes = [8, 8], strides = [1, 1]} : vector<8x192xf32> to vector<8x8xf32>
      %37 = vector.extract_strided_slice %13 {offsets = [0, 176], sizes = [8, 8], strides = [1, 1]} : vector<8x192xf32> to vector<8x8xf32>
      %38 = tpu.concatenate %14, %15, %16, %17, %18, %19, %20, %21, %22, %23, %24, %25, %26, %27, %28, %29 in 1 : vector<8x8xf32>, vector<8x8xf32>, vector<8x8xf32>, vector<8x8xf32>, vector<8x8xf32>, vector<8x8xf32>, vector<8x8xf32>, vector<8x8xf32>, vector<8x8xf32>, vector<8x8xf32>, vector<8x8xf32>, vector<8x8xf32>, vector<8x8xf32>, vector<8x8xf32>, vector<8x8xf32>, vector<8x8xf32> -> vector<8x128xf32>
      %39 = tpu.concatenate %30, %31, %32, %33, %34, %35, %36, %37 in 1 : vector<8x8xf32>, vector<8x8xf32>, vector<8x8xf32>, vector<8x8xf32>, vector<8x8xf32>, vector<8x8xf32>, vector<8x8xf32>, vector<8x8xf32> -> vector<8x64xf32>
      %40 = tpu.concatenate %38, %39 in 1 : vector<8x128xf32>, vector<8x64xf32> -> vector<8x192xf32>
      %c0_13 = arith.constant 0 : index
      %c0_14 = arith.constant 0 : index
      %41 = vector.load %arg6[%c0_13, %c0_14] : memref<8x192xf32, #tpu.memory_space<vmem>>, vector<8x192xf32>
      %42 = arith.mulf %13, %41 : vector<8x192xf32>
      %c0_15 = arith.constant 0 : index
      %c0_16 = arith.constant 0 : index
      %43 = vector.load %arg7[%c0_15, %c0_16] : memref<8x192xf32, #tpu.memory_space<vmem>>, vector<8x192xf32>
      %44 = arith.mulf %40, %43 : vector<8x192xf32>
      %45 = arith.addf %42, %44 : vector<8x192xf32>
      %46 = arith.truncf %45 : vector<8x192xf32> to vector<8x192xbf16>
      %c0_17 = arith.constant 0 : index
      %c0_18 = arith.constant 0 : index
      %c0_19 = arith.constant 0 : index
      %47 = vector.load %arg8[%c0_17, %c0_18, %c0_19] : memref<1x8x192xbf16, #tpu.memory_space<vmem>>, vector<1x8x192xbf16>
      %48 = vector.shape_cast %47 : vector<1x8x192xbf16> to vector<8x192xbf16>
      %49 = vector.shape_cast %46 : vector<8x192xbf16> to vector<1x8x192xbf16>
      tpu.vector_store %arg8[%c0_17, %c0_18, %c0_19], %49 {strides = array<i32>} : memref<1x8x192xbf16, #tpu.memory_space<vmem>>, vector<1x8x192xbf16>,
    } else {
    }
    return
  }
  func.func @transform_0(%arg0: i32, %arg1: i32, %arg2: i32, %arg3: i32) -> (i32, i32, i32) {
    %c0_i32 = arith.constant 0 : i32
    return %arg0, %arg1, %arg3 : i32, i32, i32
  }
  func.func @transform_1(%arg0: i32, %arg1: i32, %arg2: i32, %arg3: i32) -> (i32, i32) {
    %c0_i32 = arith.constant 0 : i32
    return %arg3, %arg2 : i32, i32
  }
  func.func @transform_2(%arg0: i32, %arg1: i32, %arg2: i32, %arg3: i32) -> (i32, i32) {
    %c0_i32 = arith.constant 0 : i32
    return %arg1, %arg2 : i32, i32
  }
  func.func @transform_3(%arg0: i32, %arg1: i32, %arg2: i32, %arg3: i32) -> (i32, i32) {
    %c0_i32 = arith.constant 0 : i32
    return %arg1, %arg2 : i32, i32
  }
  func.func @transform_4(%arg0: i32, %arg1: i32, %arg2: i32, %arg3: i32) -> (i32, i32, i32) {
    %c0_i32 = arith.constant 0 : i32
    return %arg0, %arg1, %arg2 : i32, i32, i32
  }
}

</mosaic_0001>

<llo_original>
// kernel: tpu_custom_call.1
$region0: #{tpu_custom_call.1}
  #allocation0 [shape = 'u32[]', space=smem, size = 0x4, offset = 0x4, fixed_abs, tag = 'smem constant byte address 0x4 - core index']
  #allocation1 [shape = 'u32[144,128]{1,0:T(1,128)}', space=vmem, size = 0x12000, scoped, tag = 'internal scratch']
  #allocation2 [shape = 'f32[8,192]{1,0:T(8,128)}', space=vmem, size = 0x2000, scoped, tag = 'scratch operand']
  %s0 = inlined_call_operand.hbm [shape: bf16[2,8,64], index: 0, kind: input, shape index: {}]
  %s1 = inlined_call_operand.hbm [shape: bf16[64,192], index: 1, kind: input, shape index: {}]
  %s2 = inlined_call_operand.hbm [shape: f32[8,192], index: 2, kind: input, shape index: {}]
  %s3 = inlined_call_operand.hbm [shape: f32[8,192], index: 3, kind: input, shape index: {}]
  %s4 = inlined_call_operand.hbm [shape: bf16[2,8,192], index: 4, kind: output, shape index: {}]
  %s5 = sld [smem:[#allocation0]]
  $region73: #{tpu_custom_call.1} parent=0
    _
  %s7 = ssub.s32 1, %s5
  %s8 = scalar_select 0, %s7, %s5
  $region1: #{tpu_custom_call.1} parent=0
    #allocation3 [shape = 'u8[4096]{0}', space=vmem, size = 0x1000, scoped, tag = 'input window, operand 0']
    #allocation4 [shape = 's32[2]{0}', space=sflag, size = 0x8, scoped, tag = 'scoped memory for tpu_custom_call.1']
    #allocation5 [shape = 's32[2]{0}', space=sflag, size = 0x8, scoped, tag = 'scoped memory for tpu_custom_call.1']
    #allocation6 [shape = 'u8[32768]{0}', space=vmem, size = 0x8000, scoped, tag = 'input window, operand 1, single buffered']
    #allocation7 [shape = 's32[1]{0}', space=sflag, size = 0x4, scoped, tag = 'scoped memory for tpu_custom_call.1']
    #allocation8 [shape = 'u8[8192]{0}', space=vmem, size = 0x2000, scoped, tag = 'input window, operand 2, single buffered']
    #allocation9 [shape = 'u8[8192]{0}', space=vmem, size = 0x2000, scoped, tag = 'input window, operand 3, single buffered']
    #allocation10 [shape = 's32[1]{0}', space=sflag, size = 0x4, scoped, tag = 'scoped memory for tpu_custom_call.1']
    #allocation11 [shape = 'u8[8192]{0}', space=vmem, size = 0x2000, scoped, tag = 'output window, operand 0']
    %9 = vsyncpa [#allocation4], 0
    %s10 = scalar_lea.sflag [#allocation4], 1
    %11 = vsyncpa %s10, 0
    %12 = vsyncpa [#allocation7], 0
    %13 = vsyncpa [#allocation10], 0
    %14 = vsyncpa [#allocation5], 0
    %s15 = scalar_lea.sflag [#allocation5], 1
    %16 = vsyncpa %s15, 0
    loop: start=0, step=1, limit=4
    $region2: #{tpu_custom_call.1} parent=1 // loop_pre_header
      _
    $region3: #{tpu_custom_call.1} parent=1 // loop_header
      %s18 = sphi 0, %s22
      %p19 = scmp.ge.s32.totalorder %s18, 4
      %s25 = sphi 0, %s51
      %s26 = sphi 0, %s47
      %s27 = sphi 0, %s43
      %s28 = sphi 0, %s39
      %s29 = sphi 0, %s25
      %s30 = sphi 0, %s26
      %s31 = sphi 0, %s27
      %s32 = sphi 0, %s28
      %s33 = sphi 0, %s29
      %s34 = sphi 0, %s30
      %s35 = sphi 0, %s31
      %s36 = sphi 0, %s32
      %s58 = sphi 0, %s60
      %s61 = sphi 0, %s58
      %s62 = sphi 0, %s61
      %s78 = sphi 0, %s62
      %s86 = sphi 0, %s88
      %s89 = sphi 0, %s86
      %s90 = sphi 0, %s89
      %s106 = sphi 0, %s90
      %s114 = sphi 0, %s116
      %s117 = sphi 0, %s114
      %s118 = sphi 0, %s117
      %s134 = sphi 0, %s118
      %s142 = sphi 0, %s144
      %s145 = sphi 0, %s142
      %s146 = sphi 0, %s145
      %s162 = sphi 0, %s146
      %s172 = sphi 0, %s174
      %s175 = sphi 0, %s172
      %s176 = sphi 0, %s175
      %s192 = sphi 0, %s176
    $region4: #{tpu_custom_call.1} parent=1 // loop_header_branch
      %21 = sbr.rel (%p19) target = $region8
    $region5: #{tpu_custom_call.1} parent=1 // loop_body
      %s23 = ssub.s32 %s18, 1
      %s24 = ssub.s32 %s18, 2
      %s37 = sadd.s32 1, %s28
      %p38 = scmp.ge.s32.totalorder %s37, 1
      %s39 = scalar_select %p38, 0, %s37
      %s40 = sadd.s32 1, %s27
      %s41 = scalar_select %p38, %s40, %s27
      %p42 = scmp.ge.s32.totalorder %s41, 1
      %s43 = scalar_select %p42, 0, %s41
      %s44 = sadd.s32 1, %s26
      %s45 = scalar_select %p42, %s44, %s26
      %p46 = scmp.ge.s32.totalorder %s45, 1
      %s47 = scalar_select %p46, 0, %s45
      %s48 = sadd.s32 1, %s25
      %s49 = scalar_select %p46, %s48, %s25
      %p50 = scmp.ge.s32.totalorder %s49, 2
      %s51 = scalar_select %p50, 0, %s49
      %s52 = ssub.s32 %s25, %s51
      %s53 = ssub.s32 %s26, %s47
      %s54 = sor.u32 %s52, %s53
      %s55 = ssub.s32 %s28, %s39
      %s56 = sor.u32 %s54, %s55
      %p57 = scmp.eq.s32.totalorder %s56, 0
      %s59 = sadd.s32 %s58, 1
      %s60 = scalar_select %p57, %s58, %s59
      %p63 = pneg %p57
      %p64 = scmp.eq.s32.totalorder %s18, 1
      %p65 = por %p63, %p64
      %p66 = scmp.ne.s32.totalorder %s58, %s61
      %p67 = scmp.eq.s32.totalorder %s18, 0
      %p68 = por %p66, %p67
      %p69 = scmp.ne.s32.totalorder %s58, %s61
      %p70 = scmp.eq.s32.totalorder %s23, 1
      %p71 = por %p69, %p70
      %p72 = scmp.ne.s32.totalorder %s61, %s62
      %p73 = scmp.eq.s32.totalorder %s23, 0
      %p74 = por %p72, %p73
      %p75 = scmp.ne.s32.totalorder %s61, %s62
      %p76 = scmp.eq.s32.totalorder %s24, 1
      %p77 = por %p75, %p76
      %p79 = scmp.ne.s32.totalorder %s62, %s78
      %p80 = scmp.eq.s32.totalorder %s24, 0
      %p81 = por %p79, %p80
      %s82 = ssub.s32 %s28, %s39
      %s83 = ssub.s32 %s27, %s43
      %s84 = sor.u32 %s82, %s83
      %p85 = scmp.eq.s32.totalorder %s84, 0
      %s87 = sadd.s32 %s86, 1
      %s88 = scalar_select %p85, %s86, %s87
      %p91 = pneg %p85
      %p92 = scmp.eq.s32.totalorder %s18, 1
      %p93 = por %p91, %p92
      %p94 = scmp.ne.s32.totalorder %s86, %s89
      %p95 = scmp.eq.s32.totalorder %s18, 0
      %p96 = por %p94, %p95
      %p97 = scmp.ne.s32.totalorder %s86, %s89
      %p98 = scmp.eq.s32.totalorder %s23, 1
      %p99 = por %p97, %p98
      %p100 = scmp.ne.s32.totalorder %s89, %s90
      %p101 = scmp.eq.s32.totalorder %s23, 0
      %p102 = por %p100, %p101
      %p103 = scmp.ne.s32.totalorder %s89, %s90
      %p104 = scmp.eq.s32.totalorder %s24, 1
      %p105 = por %p103, %p104
      %p107 = scmp.ne.s32.totalorder %s90, %s106
      %p108 = scmp.eq.s32.totalorder %s24, 0
      %p109 = por %p107, %p108
      %s110 = ssub.s32 %s26, %s47
      %s111 = ssub.s32 %s27, %s43
      %s112 = sor.u32 %s110, %s111
      %p113 = scmp.eq.s32.totalorder %s112, 0
      %s115 = sadd.s32 %s114, 1
      %s116 = scalar_select %p113, %s114, %s115
      %p119 = pneg %p113
      %p120 = scmp.eq.s32.totalorder %s18, 1
      %p121 = por %p119, %p120
      %p122 = scmp.ne.s32.totalorder %s114, %s117
      %p123 = scmp.eq.s32.totalorder %s18, 0
      %p124 = por %p122, %p123
      %p125 = scmp.ne.s32.totalorder %s114, %s117
      %p126 = scmp.eq.s32.totalorder %s23, 1
      %p127 = por %p125, %p126
      %p128 = scmp.ne.s32.totalorder %s117, %s118
      %p129 = scmp.eq.s32.totalorder %s23, 0
      %p130 = por %p128, %p129
      %p131 = scmp.ne.s32.totalorder %s117, %s118
      %p132 = scmp.eq.s32.totalorder %s24, 1
      %p133 = por %p131, %p132
      %p135 = scmp.ne.s32.totalorder %s118, %s134
      %p136 = scmp.eq.s32.totalorder %s24, 0
      %p137 = por %p135, %p136
      %s138 = ssub.s32 %s26, %s47
      %s139 = ssub.s32 %s27, %s43
      %s140 = sor.u32 %s138, %s139
      %p141 = scmp.eq.s32.totalorder %s140, 0
      %s143 = sadd.s32 %s142, 1
      %s144 = scalar_select %p141, %s142, %s143
      %p147 = pneg %p141
      %p148 = scmp.eq.s32.totalorder %s18, 1
      %p149 = por %p147, %p148
      %p150 = scmp.ne.s32.totalorder %s142, %s145
      %p151 = scmp.eq.s32.totalorder %s18, 0
      %p152 = por %p150, %p151
      %p153 = scmp.ne.s32.totalorder %s142, %s145
      %p154 = scmp.eq.s32.totalorder %s23, 1
      %p155 = por %p153, %p154
      %p156 = scmp.ne.s32.totalorder %s145, %s146
      %p157 = scmp.eq.s32.totalorder %s23, 0
      %p158 = por %p156, %p157
      %p159 = scmp.ne.s32.totalorder %s145, %s146
      %p160 = scmp.eq.s32.totalorder %s24, 1
      %p161 = por %p159, %p160
      %p163 = scmp.ne.s32.totalorder %s146, %s162
      %p164 = scmp.eq.s32.totalorder %s24, 0
      %p165 = por %p163, %p164
      %s166 = ssub.s32 %s25, %s51
      %s167 = ssub.s32 %s26, %s47
      %s168 = sor.u32 %s166, %s167
      %s169 = ssub.s32 %s27, %s43
      %s170 = sor.u32 %s168, %s169
      %p171 = scmp.eq.s32.totalorder %s170, 0
      %s173 = sadd.s32 %s172, 1
      %s174 = scalar_select %p171, %s172, %s173
      %p177 = pneg %p171
      %p178 = scmp.eq.s32.totalorder %s18, 1
      %p179 = por %p177, %p178
      %p180 = scmp.ne.s32.totalorder %s172, %s175
      %p181 = scmp.eq.s32.totalorder %s18, 0
      %p182 = por %p180, %p181
      %p183 = scmp.ne.s32.totalorder %s172, %s175
      %p184 = scmp.eq.s32.totalorder %s23, 1
      %p185 = por %p183, %p184
      %p186 = scmp.ne.s32.totalorder %s175, %s176
      %p187 = scmp.eq.s32.totalorder %s23, 0
      %p188 = por %p186, %p187
      %p189 = scmp.ne.s32.totalorder %s175, %s176
      %p190 = scmp.eq.s32.totalorder %s24, 1
      %p191 = por %p189, %p190
      %p193 = scmp.ne.s32.totalorder %s176, %s192
      %p194 = scmp.eq.s32.totalorder %s24, 0
      %p195 = por %p193, %p194
      %p196 = scmp.le.s32.totalorder 1, %s18
      %p197 = scmp.lt.s32.totalorder %s18, 3
      %p198 = pnand %p196, %p197
      %p199 = pneg %p198
      // Predicated region
      $region9: #{tpu_custom_call.1} parent=5 // pred_check
        _
      $region10: #{tpu_custom_call.1} parent=5 // pred_check_branch
        %201 = sbr.rel (%p198) target = $region12
      $region11: #{tpu_custom_call.1} parent=5 // pred_region
        %s202 = ssub.s32 %s18, 1
        // Predicated region
        $region13: #{tpu_custom_call.1} parent=11 // pred_check
          %p203 = pneg %p102
        $region14: #{tpu_custom_call.1} parent=11 // pred_check_branch
          %205 = sbr.rel (%p203) target = $region16
        $region15: #{tpu_custom_call.1} parent=11 // pred_region
          %s206 = smul.u32 8, %s32
          %s207 = smul.u32 2, %s31
          %s209 = ssub.s32 1024, 1024
          %210 = vsyncadd [#allocation7], %s209
          %s211 = smul.addr %s206, 2
          %s212 = sadd.s32 %s207, %s211
          %s213 = smul.addr %s212, 64
          %s214 = scalar_lea.hbm %s1, %s213
          %s215 = sshll.u32 [#allocation6], 4
          %s216 = int_to_ptr.vmem [resolvable:$true] %s215
          %221 = dma.hbm_to_vmem [thread:$0]  %s214, 1024, %s216, [#allocation7], 128, 128, 8
        $region16: #{tpu_custom_call.1} parent=11 // pred_fallthru
          _
        // Predicated region
        $region17: #{tpu_custom_call.1} parent=11 // pred_check
          %p222 = pneg %p130
        $region18: #{tpu_custom_call.1} parent=11 // pred_check_branch
          %224 = sbr.rel (%p222) target = $region20
        $region19: #{tpu_custom_call.1} parent=11 // pred_region
          %s225 = smul.u32 2, %s31
          %s227 = ssub.s32 256, 256
          %228 = vsyncadd [#allocation7], %s227
          %s229 = smul.addr %s30, 2
          %s230 = sadd.s32 %s225, %s229
          %s231 = smul.addr %s230, 128
          %s232 = scalar_lea.hbm %s2, %s231
          %s234 = sshll.u32 [#allocation8], 4
          %s235 = int_to_ptr.vmem [resolvable:$true] %s234
          %237 = dma.hbm_to_vmem [thread:$0]  %s232, 256, %s235, [#allocation7]
        $region20: #{tpu_custom_call.1} parent=11 // pred_fallthru
          _
        // Predicated region
        $region21: #{tpu_custom_call.1} parent=11 // pred_check
          %p238 = pneg %p158
        $region22: #{tpu_custom_call.1} parent=11 // pred_check_branch
          %240 = sbr.rel (%p238) target = $region24
        $region23: #{tpu_custom_call.1} parent=11 // pred_region
          %s241 = smul.u32 2, %s31
          %s243 = ssub.s32 256, 256
          %244 = vsyncadd [#allocation10], %s243
          %s245 = smul.addr %s30, 2
          %s246 = sadd.s32 %s241, %s245
          %s247 = smul.addr %s246, 128
          %s248 = scalar_lea.hbm %s3, %s247
          %s250 = sshll.u32 [#allocation9], 4
          %s251 = int_to_ptr.vmem [resolvable:$true] %s250
          %253 = dma.hbm_to_vmem [thread:$0]  %s248, 256, %s251, [#allocation10]
        $region24: #{tpu_custom_call.1} parent=11 // pred_fallthru
          _
      $region12: #{tpu_custom_call.1} parent=5 // pred_fallthru
        _
      %p254 = scmp.lt.s32.totalorder %s18, 2
      // Predicated region
      $region25: #{tpu_custom_call.1} parent=5 // pred_check
        %p255 = pneg %p254
      $region26: #{tpu_custom_call.1} parent=5 // pred_check_branch
        %257 = sbr.rel (%p255) target = $region28
      $region27: #{tpu_custom_call.1} parent=5 // pred_region
        // Predicated region
        $region29: #{tpu_custom_call.1} parent=27 // pred_check
          %p258 = pneg %p68
        $region30: #{tpu_custom_call.1} parent=27 // pred_check_branch
          %260 = sbr.rel (%p258) target = $region32
        $region31: #{tpu_custom_call.1} parent=27 // pred_region
          %s261 = sand.u32 %s58, 1
          %s262 = scalar_lea.sflag [#allocation4], %s261
          %s263 = sand.u32 %s58, 1
          %s264 = smul.addr %s263, 4
          %s265 = scalar_lea.vmem [#allocation3], %s264
          %s267 = ssub.s32 64, 64
          %268 = vsyncadd %s262, %s267
          %s269 = sadd.s32 %s28, %s26
          %s270 = sadd.s32 %s269, %s25
          %s271 = smul.addr %s270, 64
          %s272 = scalar_lea.hbm %s0, %s271
          %s274 = sshll.u32 %s265, 4
          %s275 = int_to_ptr.vmem [resolvable:$true] %s274
          %277 = dma.hbm_to_vmem [thread:$0]  %s272, 64, %s275, %s262
        $region32: #{tpu_custom_call.1} parent=27 // pred_fallthru
          _
      $region28: #{tpu_custom_call.1} parent=5 // pred_fallthru
        _
      %p278 = scmp.le.s32.totalorder 1, %s18
      %p279 = scmp.lt.s32.totalorder %s18, 3
      %p280 = pnand %p278, %p279
      %p281 = pneg %p280
      // Predicated region
      $region33: #{tpu_custom_call.1} parent=5 // pred_check
        _
      $region34: #{tpu_custom_call.1} parent=5 // pred_check_branch
        %283 = sbr.rel (%p280) target = $region36
      $region35: #{tpu_custom_call.1} parent=5 // pred_region
        %s284 = ssub.s32 %s18, 1
        %s285 = sand.u32 %s61, 1
        %s286 = scalar_lea.sflag [#allocation4], %s285
        %s287 = sand.u32 %s61, 1
        %s288 = smul.addr %s287, 4
        %s289 = scalar_lea.vmem [#allocation3], %s288
        // Predicated region
        $region37: #{tpu_custom_call.1} parent=35 // pred_check
          %p290 = pneg %p74
        $region38: #{tpu_custom_call.1} parent=35 // pred_check_branch
          %292 = sbr.rel (%p290) target = $region40
        $region39: #{tpu_custom_call.1} parent=35 // pred_region
          %293 = dma.done %s286, 64
        $region40: #{tpu_custom_call.1} parent=35 // pred_fallthru
          _
        // Predicated region
        $region41: #{tpu_custom_call.1} parent=35 // pred_check
          %p294 = pneg %p102
        $region42: #{tpu_custom_call.1} parent=35 // pred_check_branch
          %296 = sbr.rel (%p294) target = $region44
        $region43: #{tpu_custom_call.1} parent=35 // pred_region
          %297 = dma.done [#allocation7], 1024
        $region44: #{tpu_custom_call.1} parent=35 // pred_fallthru
          _
        // Predicated region
        $region45: #{tpu_custom_call.1} parent=35 // pred_check
          %p298 = pneg %p130
        $region46: #{tpu_custom_call.1} parent=35 // pred_check_branch
          %300 = sbr.rel (%p298) target = $region48
        $region47: #{tpu_custom_call.1} parent=35 // pred_region
          %301 = dma.done [#allocation7], 256
        $region48: #{tpu_custom_call.1} parent=35 // pred_fallthru
          _
        // Predicated region
        $region49: #{tpu_custom_call.1} parent=35 // pred_check
          %p302 = pneg %p158
        $region50: #{tpu_custom_call.1} parent=35 // pred_check_branch
          %304 = sbr.rel (%p302) target = $region52
        $region51: #{tpu_custom_call.1} parent=35 // pred_region
          %305 = dma.done [#allocation10], 256
        $region52: #{tpu_custom_call.1} parent=35 // pred_fallthru
          _
        %s306 = sand.u32 %s61, 1
        %s307 = scalar_lea.sflag [#allocation4], %s306
        %s308 = sand.u32 %s61, 1
        %s309 = smul.addr %s308, 4
        %s310 = scalar_lea.vmem [#allocation3], %s309
        %p311 = pneg %p74
        %p312 = pneg %p71
        %p313 = pneg %p102
        %p314 = pneg %p99
        %p315 = pneg %p130
        %p316 = pneg %p127
        %p317 = pneg %p158
        %p318 = pneg %p155
        %p319 = pneg %p188
        %p320 = pneg %p185
        %s321 = sand.u32 %s175, 1
        %s322 = scalar_lea.sflag [#allocation5], %s321
        %s323 = sand.u32 %s175, 1
        %s324 = smul.addr %s323, 8
        %s325 = scalar_lea.vmem [#allocation11], %s324
        %s326 = smul.u32 8, %s32
        %s327 = smul.u32 2, %s31
        %s328 = smul.u32 2, %s31
        %s329 = smul.u32 2, %s31
        %s330 = smul.u32 2, %s31
        %p332 = scmp.eq.s32.totalorder %s32, 0
        // Predicated region
        $region53: #{tpu_custom_call.1} parent=35 // pred_check
          %p333 = pneg %p332
        $region54: #{tpu_custom_call.1} parent=35 // pred_check_branch
          %335 = sbr.rel (%p333) target = $region56
        $region55: #{tpu_custom_call.1} parent=35 // pred_region
          %336 = vst [vmem:[#allocation2] sm:$0xff] 0.0
          %vm337 = vcmask 523264
          %338 = vst.msk [vmem:[#allocation2 + $0x8] sm:$0xff] %vm337, 0.0
        $region56: #{tpu_custom_call.1} parent=35 // pred_fallthru
          _
        %v339 = vld [vmem:[#allocation2] sm:$0xff]
        %v340 = vld [vmem:[#allocation2 + $0x8] sm:$0xff]
        %v341 = vld [vmem:[%s289] sm:$0xf]
        %v342 = vld [vmem:[#allocation6] sm:$0xff]
        %v343 = vld [vmem:[#allocation6 + $0x8] sm:$0xff]
        %v344 = vld [vmem:[#allocation6 + $0x10] sm:$0xff]
        %v345 = vld [vmem:[#allocation6 + $0x18] sm:$0xff]
        %v346 = vld [vmem:[#allocation6 + $0x20] sm:$0xff]
        %v347 = vld [vmem:[#allocation6 + $0x28] sm:$0xff]
        %v348 = vld [vmem:[#allocation6 + $0x30] sm:$0xff]
        %v349 = vld [vmem:[#allocation6 + $0x38] sm:$0xff]
        %v358 = vunpack.c.l.b16 %v342
        %v359 = vunpack.c.h.b16 %v342
        %v360 = vunpack.c.l.b16 %v343
        %v361 = vunpack.c.h.b16 %v343
        %v362 = vunpack.c.l.b16 %v344
        %v363 = vunpack.c.h.b16 %v344
        %v364 = vunpack.c.l.b16 %v345
        %v365 = vunpack.c.h.b16 %v345
        %v366 = vunpack.c.l.b16 %v346
        %v367 = vunpack.c.h.b16 %v346
        %v368 = vunpack.c.l.b16 %v347
        %v369 = vunpack.c.h.b16 %v347
        %v370 = vunpack.c.l.b16 %v348
        %v371 = vunpack.c.h.b16 %v348
        %v372 = vunpack.c.l.b16 %v349
        %v373 = vunpack.c.h.b16 %v349
        %v374 = vpack.c.b16 %v360, %v358
        %v375 = vpack.c.b16 %v361, %v359
        %v376 = vpack.c.b16 %v364, %v362
        %v377 = vpack.c.b16 %v365, %v363
        %v378 = vpack.c.b16 %v368, %v366
        %v379 = vpack.c.b16 %v369, %v367
        %v380 = vpack.c.b16 %v372, %v370
        %v381 = vpack.c.b16 %v373, %v371
        %vm390 = vcmask 523264
        %v392 = vsel %vm390, %v341, 0
        %394 = vmatprep.subr.bf16.mxu0 %v375
        %395 = vmatpush1.bf16.msra.mxu0 %v374
        %396 = vmatprep.subr.bf16.mxu0 %v377
        %397 = vmatpush1.bf16.msra.mxu0 %v376
        %398 = vmatprep.subr.bf16.mxu0 %v379
        %399 = vmatpush1.bf16.msra.mxu0 %v378
        %400 = vmatprep.subr.bf16.mxu0 %v381
        %401 = vmatpush1.bf16.msra.mxu0 %v380
        %402 = vmatprep.subr.bf16.mxu0 0
        %403 = vmatpush1.bf16.msra.mxu0 0
        %404 = vmatprep.subr.bf16.mxu0 0
        %405 = vmatpush1.bf16.msra.mxu0 0
        %406 = vmatprep.subr.bf16.mxu0 0
        %407 = vmatpush1.bf16.msra.mxu0 0
        %408 = vmatprep.subr.bf16.mxu0 0
        %409 = vmatpush1.bf16.msra.mxu0 0
        %410 = vmatprep.subr.bf16.mxu0 0
        %411 = vmatpush1.bf16.msra.mxu0 0
        %412 = vmatprep.subr.bf16.mxu0 0
        %413 = vmatpush1.bf16.msra.mxu0 0
        %414 = vmatprep.subr.bf16.mxu0 0
        %415 = vmatpush1.bf16.msra.mxu0 0
        %416 = vmatprep.subr.bf16.mxu0 0
        %417 = vmatpush1.bf16.msra.mxu0 0
        %418 = vmatprep.subr.bf16.mxu0 0
        %419 = vmatpush1.bf16.msra.mxu0 0
        %420 = vmatprep.subr.bf16.mxu0 0
        %421 = vmatpush1.bf16.msra.mxu0 0
        %422 = vmatprep.subr.bf16.mxu0 0
        %423 = vmatpush1.bf16.msra.mxu0 0
        %424 = vmatprep.subr.bf16.mxu0 0
        %425 = vmatpush1.bf16.msra.mxu0 0
        %426 = vmatprep.mubr.bf16.mxu0 0
        %427 = vmatmul.mubr.bf16.gmra.mrb[0].mxu0 %v392
        %v428 = vpop.f32.mrb[0].mxu0
        %v429 = vadd.f32 0.0, %v428
        %v430 = vpop.f32.mrb[0].mxu0
        %v431 = vadd.f32 0.0, %v430
        %v432 = vpop.f32.mrb[0].mxu0
        %v433 = vpop.f32.mrb[0].mxu0
        %434 = vdwg.mxu0
        %v435 = vadd.f32 %v339, %v429
        %v436 = vadd.f32 %v340, %v431
        %437 = vst [vmem:[#allocation2] sm:$0xff] %v435
        %438 = vst.msk [vmem:[#allocation2 + $0x8] sm:$0xff] %vm390, %v436
        // Predicated region
        $region57: #{tpu_custom_call.1} parent=35 // pred_check
          %p439 = pneg %p332
        $region58: #{tpu_custom_call.1} parent=35 // pred_check_branch
          %441 = sbr.rel (%p439) target = $region60
        $region59: #{tpu_custom_call.1} parent=35 // pred_region
          %v442 = vld [vmem:[#allocation2] sm:$0xff]
          %v443 = vld [vmem:[#allocation2 + $0x8] sm:$0xff]
          %445 = vrot.lane.b32.xlu0 %v442, 120
          %v446 = vpop.permute.xlu0 %445
          %448 = vrot.lane.b32.xlu0 %v442, 8
          %v449 = vpop.permute.xlu0 %448
          %vm451 = vcmask 64512
          %v452 = vsel %vm451, %v446, %v449
          %vm453 = vcmask 130048
          %v454 = vsel %vm453, %v452, %v446
          %vm455 = vcmask 195584
          %v456 = vsel %vm455, %v454, %v449
          %vm457 = vcmask 261120
          %v458 = vsel %vm457, %v456, %v446
          %vm459 = vcmask 326656
          %v460 = vsel %vm459, %v458, %v449
          %vm461 = vcmask 392192
          %v462 = vsel %vm461, %v460, %v446
          %vm463 = vcmask 457728
          %v464 = vsel %vm463, %v462, %v449
          %v465 = vsel %vm390, %v464, %v446
          %vm466 = vcmask 588800
          %v467 = vsel %vm466, %v465, %v449
          %vm468 = vcmask 654336
          %v469 = vsel %vm468, %v467, %v446
          %vm470 = vcmask 719872
          %v471 = vsel %vm470, %v469, %v449
          %vm472 = vcmask 785408
          %v473 = vsel %vm472, %v471, %v446
          %vm474 = vcmask 850944
          %v475 = vsel %vm474, %v473, %v449
          %vm476 = vcmask 916480
          %v477 = vsel %vm476, %v475, %v446
          %vm478 = vcmask 982016
          %v479 = vsel %vm478, %v477, %v449
          %481 = vrot.lane.b32.xlu0 %v443, 120
          %v482 = vpop.permute.xlu0 %481
          %484 = vrot.lane.b32.xlu0 %v443, 8
          %v485 = vpop.permute.xlu0 %484
          %v487 = vsel %vm451, %v482, %v485
          %v488 = vsel %vm453, %v487, %v482
          %v489 = vsel %vm455, %v488, %v485
          %v490 = vsel %vm457, %v489, %v482
          %v491 = vsel %vm459, %v490, %v485
          %v492 = vsel %vm461, %v491, %v482
          %v493 = vsel %vm463, %v492, %v485
          %v494 = vld [vmem:[#allocation8] sm:$0xff]
          %v495 = vld [vmem:[#allocation8 + $0x8] sm:$0xff]
          %v496 = vmul.f32 %v442, %v494
          %v497 = vmul.f32 %v443, %v495
          %v498 = vld [vmem:[#allocation9] sm:$0xff]
          %v499 = vld [vmem:[#allocation9 + $0x8] sm:$0xff]
          %v500 = vmul.f32 %v479, %v498
          %v501 = vmul.f32 %v493, %v499
          %v502 = vadd.f32 %v496, %v500
          %v503 = vadd.f32 %v497, %v501
          %v504 = vpack.c.bf16 %v502, %v502
          %v505 = vpack.c.bf16 %v503, %v503
          %v508 = vunpack.c.l.b16 %v504
          %v509 = vunpack.c.l.b16 %v505
          %v510 = vpack.c.b16 %v509, %v508
          %vm512 = vcmask 1043456
          %vm513 = vcmask 523268
          %vm514 = vmor %vm513, %vm512
          %515 = vst.msk [vmem:[%s325] sm:$0xff] %vm514, %v510
        $region60: #{tpu_custom_call.1} parent=35 // pred_fallthru
          _
        %s516 = sand.u32 %s175, 1
        %s517 = scalar_lea.sflag [#allocation5], %s516
        %s518 = sand.u32 %s175, 1
        %s519 = smul.addr %s518, 8
        %s520 = scalar_lea.vmem [#allocation11], %s519
        // Predicated region
        $region61: #{tpu_custom_call.1} parent=35 // pred_check
          %p521 = pneg %p185
        $region62: #{tpu_custom_call.1} parent=35 // pred_check_branch
          %523 = sbr.rel (%p521) target = $region64
        $region63: #{tpu_custom_call.1} parent=35 // pred_region
          %s524 = smul.u32 2, %s31
          %s526 = ssub.s32 128, 128
          %527 = vsyncadd %s517, %s526
          %s528 = smul.addr %s30, 2
          %s529 = sadd.s32 %s524, %s528
          %s530 = smul.addr %s29, 2
          %s531 = sadd.s32 %s529, %s530
          %s532 = smul.addr %s531, 64
          %s533 = scalar_lea.hbm %s4, %s532
          %s535 = sshll.u32 %s520, 4
          %s536 = int_to_ptr.vmem [resolvable:$true] %s535
          %538 = dma.vmem_to_hbm [thread:$0]  %s536, 128, %s533, %s517
        $region64: #{tpu_custom_call.1} parent=35 // pred_fallthru
          _
      $region36: #{tpu_custom_call.1} parent=5 // pred_fallthru
        _
      %p539 = scmp.le.s32.totalorder 2, %s18
      // Predicated region
      $region65: #{tpu_custom_call.1} parent=5 // pred_check
        %p540 = pneg %p539
      $region66: #{tpu_custom_call.1} parent=5 // pred_check_branch
        %542 = sbr.rel (%p540) target = $region68
      $region67: #{tpu_custom_call.1} parent=5 // pred_region
        %s543 = ssub.s32 %s18, 2
        // Predicated region
        $region69: #{tpu_custom_call.1} parent=67 // pred_check
          %p544 = pneg %p191
        $region70: #{tpu_custom_call.1} parent=67 // pred_check_branch
          %546 = sbr.rel (%p544) target = $region72
        $region71: #{tpu_custom_call.1} parent=67 // pred_region
          %s547 = sand.u32 %s176, 1
          %s548 = scalar_lea.sflag [#allocation5], %s547
          %s549 = sand.u32 %s176, 1
          %s550 = smul.addr %s549, 8
          %s551 = scalar_lea.vmem [#allocation11], %s550
          %552 = dma.done %s548, 128
        $region72: #{tpu_custom_call.1} parent=67 // pred_fallthru
          _
      $region68: #{tpu_custom_call.1} parent=5 // pred_fallthru
        _
    $region6: #{tpu_custom_call.1} parent=1 // loop_footer
      %s22 = sadd.s32 1, %s18
    $region7: #{tpu_custom_call.1} parent=1 // loop_footer_branch
      %17 = sbr.rel target = $region3
    $region8: #{tpu_custom_call.1} parent=1 // loop_exit
      _
    %553 = vsyncpa [#allocation4], 1
    %s554 = scalar_lea.sflag [#allocation4], 1
    %555 = vsyncpa %s554, 1
    %556 = vsyncpa [#allocation7], 1
    %557 = vsyncpa [#allocation10], 1
    %558 = vsyncpa [#allocation5], 1
    %s559 = scalar_lea.sflag [#allocation5], 1
    %560 = vsyncpa %s559, 1

</llo_original>
